<compile_context>
chip_gen: v6e
topology: v6e:2x2x1
jax: 0.10.0
libtpu: 0.0.40
codegen_flags: <defaults>
</compile_context>

<pallas_src>
import functools

import jax
import jax.numpy as jnp
from jax.experimental import pallas as pl
from jax.experimental.pallas import tpu as pltpu


def _round_up(x, m):
    return ((x + m - 1) // m) * m


def _cdiv(a, b):
    return (a + b - 1) // b


def td3_actor_kernel(x_ref, w1_ref, b1_ref, w2_ref, b2_ref, w3_ref, b3_ref,
                     o_ref):
    # x_ref: (TB, state_dim) f32 batch tile; cast to bf16 in-kernel (VPU,
    # hidden under the MXU work).  Weights bf16, biases f32.
    x = x_ref[...].astype(jnp.bfloat16)

    # Layer 1: Linear(state_dim, 256) + ReLU   (bf16 MXU, f32 accumulate)
    h1 = jnp.dot(x, w1_ref[...], preferred_element_type=jnp.float32)
    h1 = jnp.maximum(h1 + b1_ref[...], 0.0)          # f32 elementwise

    # Layer 2: Linear(256, 256) + ReLU
    h2 = jnp.dot(h1.astype(jnp.bfloat16), w2_ref[...],
                 preferred_element_type=jnp.float32)
    h2 = jnp.maximum(h2 + b2_ref[...], 0.0)

    # Layer 3: Linear(256, action_dim) + Tanh   (unpadded output block)
    h3 = jnp.dot(h2.astype(jnp.bfloat16), w3_ref[...],
                 preferred_element_type=jnp.float32)
    o_ref[...] = jnp.tanh(h3 + b3_ref[...]).astype(o_ref.dtype)


def prepare_params(params):
    """One-time dtype conversion (hoisted out of the per-call hot path).

    Weights -> bf16 (native MXU path, half the resident VMEM / DMA bytes),
    biases -> f32 (row vectors) for the f32 elementwise path.
    """
    w1, b1, w2, b2, w3, b3 = params
    hidden = w1.shape[1]
    action_dim = w3.shape[1]
    return (
        w1.astype(jnp.bfloat16),
        jnp.asarray(b1, jnp.float32).reshape(1, hidden),
        w2.astype(jnp.bfloat16),
        jnp.asarray(b2, jnp.float32).reshape(1, hidden),
        w3.astype(jnp.bfloat16),
        jnp.asarray(b3, jnp.float32).reshape(1, action_dim),
    )


def _pick_batch_tile(B, tile_b):
    """16-aligned batch tile that minimizes padding and feeds both v7x TCs."""
    num_tiles = _cdiv(B, tile_b)
    # v7x has 2 TensorCores: give each core at least one tile when the batch
    # is big enough, and keep the tile count even so neither core idles.
    if B >= 32:
        num_tiles = max(num_tiles, 2)
    if num_tiles > 1 and num_tiles % 2:
        num_tiles += 1
    TB = _round_up(_cdiv(B, num_tiles), 16)
    B_pad = _round_up(B, TB)
    return TB, B_pad


@functools.partial(jax.jit, static_argnames=("tile_b",))
def td3_actor_forward(state, prepared_params, *, tile_b=1024):
    """state: [B, state_dim] float32 -> action: [B, action_dim] float32.

    `prepared_params` must come from prepare_params() (bf16 weights,
    f32 (1, H) biases) so no per-call casting happens here.
    """
    w1_bf, b1_f, w2_bf, b2_f, w3_bf, b3_f = prepared_params
    B, state_dim = state.shape
    action_dim = w3_bf.shape[1]

    # ---- batch tiling (minimal padding, even tile count for v7x) ----------
    TB, B_pad = _pick_batch_tile(B, tile_b)
    if B_pad != B:
        state = jnp.pad(state, ((0, B_pad - B), (0, 0)))
    num_tiles = B_pad // TB

    # Weights/biases: full-array blocks, constant index_map -> VMEM-resident.
    const_spec = lambda a: pl.BlockSpec(a.shape, lambda i: (0, 0))

    out_pad = pl.pallas_call(
        td3_actor_kernel,
        out_shape=jax.ShapeDtypeStruct((B_pad, action_dim), jnp.float32),
        grid=(num_tiles,),
        in_specs=[
            pl.BlockSpec((TB, state_dim), lambda i: (i, 0)),   # f32 state tile
            const_spec(w1_bf), const_spec(b1_f),
            const_spec(w2_bf), const_spec(b2_f),
            const_spec(w3_bf), const_spec(b3_f),
        ],
        # Block lane-dim equals the full array dim -> legal even when
        # action_dim is not a multiple of 128.
        out_specs=pl.BlockSpec((TB, action_dim), lambda i: (i, 0)),
        compiler_params=pltpu.CompilerParams(
            dimension_semantics=("parallel",)),
    )(state, w1_bf, b1_f, w2_bf, b2_f, w3_bf, b3_f)

    # Slice off batch padding (lane dim is already exact).
    return out_pad[:B, :]


def init_params(key, state_dim, action_dim, hidden=256):
    """Deterministic He-style init.  Weights stored as [in, out], f32."""
    k1, k2, k3 = jax.random.split(key, 3)
    w1 = jax.random.normal(k1, (state_dim, hidden), jnp.float32) * (
        1.0 / jnp.sqrt(state_dim))
    b1 = jnp.zeros((1, hidden), jnp.float32)
    w2 = jax.random.normal(k2, (hidden, hidden), jnp.float32) * (
        1.0 / jnp.sqrt(hidden))
    b2 = jnp.zeros((1, hidden), jnp.float32)
    w3 = jax.random.normal(k3, (hidden, action_dim), jnp.float32) * (
        1.0 / jnp.sqrt(hidden))
    b3 = jnp.zeros((1, action_dim), jnp.float32)
    return (w1, b1, w2, b2, w3, b3)


def reference_forward(state, params):
    w1, b1, w2, b2, w3, b3 = params
    h = jnp.maximum(state @ w1 + b1, 0.0)
    h = jnp.maximum(h @ w2 + b2, 0.0)
    return jnp.tanh(h @ w3 + b3)


if __name__ == "__main__":
    key = jax.random.PRNGKey(0)
    k_params, k_state = jax.random.split(key)

    batch, state_dim, action_dim = 8, 16, 4
    params = init_params(k_params, state_dim, action_dim)
    prepared = prepare_params(params)          # one-time bf16/f32 conversion
    state = jax.random.normal(k_state, (batch, state_dim), jnp.float32)

    out = td3_actor_forward(state, prepared)
    out = jax.block_until_ready(out)

    ref = reference_forward(state, params)
    assert out.shape == (batch, action_dim)
    # bf16 MXU inputs/activations with f32 accumulation -> loose tolerance.
    assert jnp.allclose(out, ref, atol=2e-2, rtol=2e-2), (
        float(jnp.max(jnp.abs(out - ref))))

    print("KERNEL_OK")
</pallas_src>

<mosaic_0001>
module attributes {stable_mosaic.version = 11 : i64} {
  func.func @td3_actor_kernel(%arg0: i32, %arg1: memref<16x16xf32, #tpu.memory_space<vmem>>, %arg2: memref<16x256xbf16, #tpu.memory_space<vmem>>, %arg3: memref<1x256xf32, #tpu.memory_space<vmem>>, %arg4: memref<256x256xbf16, #tpu.memory_space<vmem>>, %arg5: memref<1x256xf32, #tpu.memory_space<vmem>>, %arg6: memref<256x4xbf16, #tpu.memory_space<vmem>>, %arg7: memref<1x4xf32, #tpu.memory_space<vmem>>, %arg8: memref<16x4xf32, #tpu.memory_space<vmem>>) attributes {dimension_semantics = [#tpu.dimension_semantics<parallel>], iteration_bounds = array<i64: 1>, scalar_prefetch = 0 : i64, scratch_operands = 0 : i64, tpu.core_type = #tpu.core_type<tc>, window_params = [{transform_indices = @transform_0, window_bounds = array<i64: 16, 16>}, {pipeline_mode = #tpu.pipeline_mode<synchronous>, transform_indices = @transform_1, window_bounds = array<i64: 16, 256>}, {pipeline_mode = #tpu.pipeline_mode<synchronous>, transform_indices = @transform_2, window_bounds = array<i64: 1, 256>}, {pipeline_mode = #tpu.pipeline_mode<synchronous>, transform_indices = @transform_3, window_bounds = array<i64: 256, 256>}, {pipeline_mode = #tpu.pipeline_mode<synchronous>, transform_indices = @transform_4, window_bounds = array<i64: 1, 256>}, {pipeline_mode = #tpu.pipeline_mode<synchronous>, transform_indices = @transform_5, window_bounds = array<i64: 256, 4>}, {pipeline_mode = #tpu.pipeline_mode<synchronous>, transform_indices = @transform_6, window_bounds = array<i64: 1, 4>}, {transform_indices = @transform_7, window_bounds = array<i64: 16, 4>}]} {
    %c0 = arith.constant 0 : index
    %c0_0 = arith.constant 0 : index
    %0 = vector.load %arg1[%c0, %c0_0] : memref<16x16xf32, #tpu.memory_space<vmem>>, vector<16x16xf32>
    %1 = arith.truncf %0 : vector<16x16xf32> to vector<16x16xbf16>
    %c0_1 = arith.constant 0 : index
    %c0_2 = arith.constant 0 : index
    %2 = vector.load %arg2[%c0_1, %c0_2] : memref<16x256xbf16, #tpu.memory_space<vmem>>, vector<16x256xbf16>
    %cst = arith.constant dense<0.000000e+00> : vector<16x256xf32>
    %3 = tpu.matmul %1, %2, %cst {dimension_numbers = #tpu.dot_dimension_numbers<[1], [0], [0], [1], [0, 0, 1, 1], [], []>} : vector<16x16xbf16>, vector<16x256xbf16>, vector<16x256xf32> -> vector<16x256xf32>
    %c0_3 = arith.constant 0 : index
    %c0_4 = arith.constant 0 : index
    %4 = vector.load %arg3[%c0_3, %c0_4] : memref<1x256xf32, #tpu.memory_space<vmem>>, vector<1x256xf32>
    %5 = vector.broadcast %4 : vector<1x256xf32> to vector<16x256xf32>
    %6 = arith.addf %3, %5 : vector<16x256xf32>
    %cst_5 = arith.constant 0.000000e+00 : f32
    %7 = vector.broadcast %cst_5 : f32 to vector<16x256xf32>
    %8 = arith.maximumf %6, %7 : vector<16x256xf32>
    %9 = arith.truncf %8 : vector<16x256xf32> to vector<16x256xbf16>
    %c0_6 = arith.constant 0 : index
    %c0_7 = arith.constant 0 : index
    %10 = vector.load %arg4[%c0_6, %c0_7] : memref<256x256xbf16, #tpu.memory_space<vmem>>, vector<256x256xbf16>
    %cst_8 = arith.constant dense<0.000000e+00> : vector<16x256xf32>
    %11 = tpu.matmul %9, %10, %cst_8 {dimension_numbers = #tpu.dot_dimension_numbers<[1], [0], [0], [1], [0, 0, 1, 1], [], []>} : vector<16x256xbf16>, vector<256x256xbf16>, vector<16x256xf32> -> vector<16x256xf32>
    %c0_9 = arith.constant 0 : index
    %c0_10 = arith.constant 0 : index
    %12 = vector.load %arg5[%c0_9, %c0_10] : memref<1x256xf32, #tpu.memory_space<vmem>>, vector<1x256xf32>
    %13 = vector.broadcast %12 : vector<1x256xf32> to vector<16x256xf32>
    %14 = arith.addf %11, %13 : vector<16x256xf32>
    %cst_11 = arith.constant 0.000000e+00 : f32
    %15 = vector.broadcast %cst_11 : f32 to vector<16x256xf32>
    %16 = arith.maximumf %14, %15 : vector<16x256xf32>
    %17 = arith.truncf %16 : vector<16x256xf32> to vector<16x256xbf16>
    %c0_12 = arith.constant 0 : index
    %c0_13 = arith.constant 0 : index
    %18 = vector.load %arg6[%c0_12, %c0_13] : memref<256x4xbf16, #tpu.memory_space<vmem>>, vector<256x4xbf16>
    %cst_14 = arith.constant dense<0.000000e+00> : vector<16x4xf32>
    %19 = tpu.matmul %17, %18, %cst_14 {dimension_numbers = #tpu.dot_dimension_numbers<[1], [0], [0], [1], [0, 0, 1, 1], [], []>} : vector<16x256xbf16>, vector<256x4xbf16>, vector<16x4xf32> -> vector<16x4xf32>
    %c0_15 = arith.constant 0 : index
    %c0_16 = arith.constant 0 : index
    %20 = vector.load %arg7[%c0_15, %c0_16] : memref<1x4xf32, #tpu.memory_space<vmem>>, vector<1x4xf32>
    %21 = vector.broadcast %20 : vector<1x4xf32> to vector<16x4xf32>
    %22 = arith.addf %19, %21 : vector<16x4xf32>
    %23 = math.tanh %22 : vector<16x4xf32>
    %c0_17 = arith.constant 0 : index
    %c0_18 = arith.constant 0 : index
    %24 = vector.load %arg8[%c0_17, %c0_18] : memref<16x4xf32, #tpu.memory_space<vmem>>, vector<16x4xf32>
    tpu.vector_store %arg8[%c0_17, %c0_18], %23 {strides = array<i32>} : memref<16x4xf32, #tpu.memory_space<vmem>>, vector<16x4xf32>,
    return
  }
  func.func @transform_0(%arg0: i32) -> (i32, i32) {
    %c0_i32 = arith.constant 0 : i32
    %c0_i32_0 = arith.constant 0 : i32
    return %arg0, %c0_i32 : i32, i32
  }
  func.func @transform_1(%arg0: i32) -> (i32, i32) {
    %c0_i32 = arith.constant 0 : i32
    %c0_i32_0 = arith.constant 0 : i32
    %c0_i32_1 = arith.constant 0 : i32
    return %c0_i32, %c0_i32_0 : i32, i32
  }
  func.func @transform_2(%arg0: i32) -> (i32, i32) {
    %c0_i32 = arith.constant 0 : i32
    %c0_i32_0 = arith.constant 0 : i32
    %c0_i32_1 = arith.constant 0 : i32
    return %c0_i32, %c0_i32_0 : i32, i32
  }
  func.func @transform_3(%arg0: i32) -> (i32, i32) {
    %c0_i32 = arith.constant 0 : i32
    %c0_i32_0 = arith.constant 0 : i32
    %c0_i32_1 = arith.constant 0 : i32
    return %c0_i32, %c0_i32_0 : i32, i32
  }
  func.func @transform_4(%arg0: i32) -> (i32, i32) {
    %c0_i32 = arith.constant 0 : i32
    %c0_i32_0 = arith.constant 0 : i32
    %c0_i32_1 = arith.constant 0 : i32
    return %c0_i32, %c0_i32_0 : i32, i32
  }
  func.func @transform_5(%arg0: i32) -> (i32, i32) {
    %c0_i32 = arith.constant 0 : i32
    %c0_i32_0 = arith.constant 0 : i32
    %c0_i32_1 = arith.constant 0 : i32
    return %c0_i32, %c0_i32_0 : i32, i32
  }
  func.func @transform_6(%arg0: i32) -> (i32, i32) {
    %c0_i32 = arith.constant 0 : i32
    %c0_i32_0 = arith.constant 0 : i32
    %c0_i32_1 = arith.constant 0 : i32
    return %c0_i32, %c0_i32_0 : i32, i32
  }
  func.func @transform_7(%arg0: i32) -> (i32, i32) {
    %c0_i32 = arith.constant 0 : i32
    %c0_i32_0 = arith.constant 0 : i32
    return %arg0, %c0_i32 : i32, i32
  }
}

</mosaic_0001>

<llo_original>
// kernel: td3_actor_forward.1
$region0: #{td3_actor_forward.1}
  #allocation0 [shape = 'u32[]', space=smem, size = 0x4, offset = 0x4, fixed_abs, tag = 'smem constant byte address 0x4 - core index']
  #allocation1 [shape = 'u32[144,128]{1,0:T(1,128)}', space=vmem, size = 0x12000, scoped, tag = 'internal scratch']
  %s0 = inlined_call_operand.vmem [shape: f32[16,16], index: 0, kind: input, shape index: {}]
  %s1 = inlined_call_operand.vmem [shape: bf16[16,256], index: 1, kind: input, shape index: {}]
  %s2 = inlined_call_operand.vmem [shape: f32[1,256], index: 2, kind: input, shape index: {}]
  %s3 = inlined_call_operand.hbm [shape: bf16[256,256], index: 3, kind: input, shape index: {}]
  %s4 = inlined_call_operand.vmem [shape: f32[1,256], index: 4, kind: input, shape index: {}]
  %s5 = inlined_call_operand.vmem [shape: bf16[256,4], index: 5, kind: input, shape index: {}]
  %s6 = inlined_call_operand.vmem [shape: f32[1,4], index: 6, kind: input, shape index: {}]
  %s7 = inlined_call_operand.vmem [shape: f32[16,4], index: 7, kind: output, shape index: {}]
  %s8 = sld [smem:[#allocation0]]
  $region42: #{td3_actor_forward.1} parent=0
    _
  %s10 = ssub.s32 1, %s8
  %s11 = scalar_select 0, %s10, %s8
  $region1: #{td3_actor_forward.1} parent=0
    #allocation2 [shape = 'u8[131072]{0}', space=vmem, size = 0x20000, scoped, tag = 'input window, operand 3, single buffered']
    #allocation3 [shape = 's32[1]{0}', space=sflag, size = 0x4, scoped, tag = 'scoped memory for td3_actor_forward.1']
    %12 = vsyncpa [#allocation3], 0
    // Predicated region
    $region2: #{td3_actor_forward.1} parent=1 // pred_check
      _
    $region3: #{td3_actor_forward.1} parent=1 // pred_check_branch
      %14 = sbr.rel (0) target = $region5
    $region4: #{td3_actor_forward.1} parent=1 // pred_region
      _
    $region5: #{td3_actor_forward.1} parent=1 // pred_fallthru
      _
    // Predicated region
    $region6: #{td3_actor_forward.1} parent=1 // pred_check
      _
    $region7: #{td3_actor_forward.1} parent=1 // pred_check_branch
      %16 = sbr.rel (0) target = $region9
    $region8: #{td3_actor_forward.1} parent=1 // pred_region
      _
    $region9: #{td3_actor_forward.1} parent=1 // pred_fallthru
      _
    // Predicated region
    $region10: #{td3_actor_forward.1} parent=1 // pred_check
      _
    $region11: #{td3_actor_forward.1} parent=1 // pred_check_branch
      %18 = sbr.rel (0) target = $region13
    $region12: #{td3_actor_forward.1} parent=1 // pred_region
      _
    $region13: #{td3_actor_forward.1} parent=1 // pred_fallthru
      _
    // Predicated region
    $region14: #{td3_actor_forward.1} parent=1 // pred_check
      _
    $region15: #{td3_actor_forward.1} parent=1 // pred_check_branch
      %20 = sbr.rel (0) target = $region17
    $region16: #{td3_actor_forward.1} parent=1 // pred_region
      %s22 = ssub.s32 4096, 4096
      %23 = vsyncadd [#allocation3], %s22
      %s24 = sshll.u32 [#allocation2], 4
      %s25 = int_to_ptr.vmem [resolvable:$true] %s24
      %30 = dma.hbm_to_vmem [thread:$0]  %s3, 4096, %s25, [#allocation3], 128, 128, 8
    $region17: #{td3_actor_forward.1} parent=1 // pred_fallthru
      _
    // Predicated region
    $region18: #{td3_actor_forward.1} parent=1 // pred_check
      _
    $region19: #{td3_actor_forward.1} parent=1 // pred_check_branch
      %32 = sbr.rel (0) target = $region21
    $region20: #{td3_actor_forward.1} parent=1 // pred_region
      _
    $region21: #{td3_actor_forward.1} parent=1 // pred_fallthru
      _
    // Predicated region
    $region22: #{td3_actor_forward.1} parent=1 // pred_check
      _
    $region23: #{td3_actor_forward.1} parent=1 // pred_check_branch
      %34 = sbr.rel (0) target = $region25
    $region24: #{td3_actor_forward.1} parent=1 // pred_region
      _
    $region25: #{td3_actor_forward.1} parent=1 // pred_fallthru
      _
    // Predicated region
    $region26: #{td3_actor_forward.1} parent=1 // pred_check
      _
    $region27: #{td3_actor_forward.1} parent=1 // pred_check_branch
      %36 = sbr.rel (0) target = $region29
    $region28: #{td3_actor_forward.1} parent=1 // pred_region
      _
    $region29: #{td3_actor_forward.1} parent=1 // pred_fallthru
      _
    // Predicated region
    $region30: #{td3_actor_forward.1} parent=1 // pred_check
      _
    $region31: #{td3_actor_forward.1} parent=1 // pred_check_branch
      %38 = sbr.rel (0) target = $region33
    $region32: #{td3_actor_forward.1} parent=1 // pred_region
      %39 = dma.done [#allocation3], 4096
    $region33: #{td3_actor_forward.1} parent=1 // pred_fallthru
      _
    %v41 = vld [vmem:[%s0] sm:$0xff]
    %v42 = vld [vmem:[%s0 + $0x8] sm:$0xff]
    %v43 = vpack.c.bf16 %v42, %v41
    %v44 = vld [vmem:[%s1] sm:$0xff]
    %v45 = vld [vmem:[%s1 + $0x8] sm:$0xff]
    %v46 = vld [vmem:[%s2] sm:$0x3]
    %v48 = vlaneseq
    %v49 = vshrl.u32 %v48, 7
    %v50 = vsub.s32 0, %v49
    %v51 = vrot.slane %v46, %v50
    %v52 = vlaneseq
    %v53 = vshrl.u32 %v52, 7
    %v54 = vsub.s32 1, %v53
    %v55 = vrot.slane %v46, %v54
    %v60 = vunpack.c.l.b16 %v44
    %v61 = vunpack.c.h.b16 %v44
    %v62 = vunpack.c.l.b16 %v45
    %v63 = vunpack.c.h.b16 %v45
    %v64 = vpack.c.b16 %v62, %v60
    %v65 = vpack.c.b16 %v63, %v61
    %vm68 = vcmask 130048
    %v70 = vsel %vm68, %v43, 0
    %72 = vmatprep.subr.bf16.mxu0 0
    %73 = vmatpush1.bf16.msra.mxu0 0
    %74 = vmatprep.subr.bf16.mxu0 0
    %75 = vmatpush1.bf16.msra.mxu0 0
    %76 = vmatprep.subr.bf16.mxu0 0
    %77 = vmatpush1.bf16.msra.mxu0 0
    %78 = vmatprep.subr.bf16.mxu0 0
    %79 = vmatpush1.bf16.msra.mxu0 0
    %80 = vmatprep.subr.bf16.mxu0 0
    %81 = vmatpush1.bf16.msra.mxu0 0
    %82 = vmatprep.subr.bf16.mxu0 0
    %83 = vmatpush1.bf16.msra.mxu0 0
    %84 = vmatprep.subr.bf16.mxu0 0
    %85 = vmatpush1.bf16.msra.mxu0 0
    %86 = vmatprep.subr.bf16.mxu0 %v65
    %87 = vmatpush1.bf16.msra.mxu0 %v64
    %88 = vmatprep.subr.bf16.mxu0 0
    %89 = vmatpush2.bf16.msra.mxu0 0
    %90 = vmatprep.subr.bf16.mxu0 0
    %91 = vmatpush2.bf16.msra.mxu0 0
    %92 = vmatprep.subr.bf16.mxu0 0
    %93 = vmatpush2.bf16.msra.mxu0 0
    %94 = vmatprep.subr.bf16.mxu0 0
    %95 = vmatpush2.bf16.msra.mxu0 0
    %96 = vmatprep.subr.bf16.mxu0 0
    %97 = vmatpush2.bf16.msra.mxu0 0
    %98 = vmatprep.subr.bf16.mxu0 0
    %99 = vmatpush2.bf16.msra.mxu0 0
    %100 = vmatprep.subr.bf16.mxu0 0
    %101 = vmatpush2.bf16.msra.mxu0 0
    %102 = vmatprep.subr.bf16.mxu0 0
    %103 = vmatpush2.bf16.msra.mxu0 0
    %104 = vmatprep.mubr.bf16.mxu0 0
    %105 = vmatmul.mubr.bf16.gmra.mxu0 %v70
    %v106 = vpop.f32.mrf.mxu0
    %v107 = vadd.f32 %v51, %v106
    %v108 = vpop.f32.mrf.mxu0
    %v109 = vadd.f32 %v55, %v108
    %v110 = vpop.f32.mrf.mxu0
    %v111 = vadd.f32 %v51, %v110
    %v112 = vpop.f32.mrf.mxu0
    %v113 = vadd.f32 %v55, %v112
    %114 = vdwg.mxu0
    %v115 = vmax.f32 %v107, 0.0
    %v116 = vmax.f32 %v109, 0.0
    %v117 = vmax.f32 %v111, 0.0
    %v118 = vmax.f32 %v113, 0.0
    %v119 = vpack.c.bf16 %v117, %v115
    %v120 = vpack.c.bf16 %v118, %v116
    %v121 = vld [vmem:[#allocation2] sm:$0xff]
    %v122 = vld [vmem:[#allocation2 + $0x8] sm:$0xff]
    %v123 = vld [vmem:[#allocation2 + $0x10] sm:$0xff]
    %v124 = vld [vmem:[#allocation2 + $0x18] sm:$0xff]
    %v125 = vld [vmem:[#allocation2 + $0x20] sm:$0xff]
    %v126 = vld [vmem:[#allocation2 + $0x28] sm:$0xff]
    %v127 = vld [vmem:[#allocation2 + $0x30] sm:$0xff]
    %v128 = vld [vmem:[#allocation2 + $0x38] sm:$0xff]
    %v129 = vld [vmem:[#allocation2 + $0x40] sm:$0xff]
    %v130 = vld [vmem:[#allocation2 + $0x48] sm:$0xff]
    %v131 = vld [vmem:[#allocation2 + $0x50] sm:$0xff]
    %v132 = vld [vmem:[#allocation2 + $0x58] sm:$0xff]
    %v133 = vld [vmem:[#allocation2 + $0x60] sm:$0xff]
    %v134 = vld [vmem:[#allocation2 + $0x68] sm:$0xff]
    %v135 = vld [vmem:[#allocation2 + $0x70] sm:$0xff]
    %v136 = vld [vmem:[#allocation2 + $0x78] sm:$0xff]
    %v137 = vld [vmem:[#allocation2 + $0x80] sm:$0xff]
    %v138 = vld [vmem:[#allocation2 + $0x88] sm:$0xff]
    %v139 = vld [vmem:[#allocation2 + $0x90] sm:$0xff]
    %v140 = vld [vmem:[#allocation2 + $0x98] sm:$0xff]
    %v141 = vld [vmem:[#allocation2 + $0xa0] sm:$0xff]
    %v142 = vld [vmem:[#allocation2 + $0xa8] sm:$0xff]
    %v143 = vld [vmem:[#allocation2 + $0xb0] sm:$0xff]
    %v144 = vld [vmem:[#allocation2 + $0xb8] sm:$0xff]
    %v145 = vld [vmem:[#allocation2 + $0xc0] sm:$0xff]
    %v146 = vld [vmem:[#allocation2 + $0xc8] sm:$0xff]
    %v147 = vld [vmem:[#allocation2 + $0xd0] sm:$0xff]
    %v148 = vld [vmem:[#allocation2 + $0xd8] sm:$0xff]
    %v149 = vld [vmem:[#allocation2 + $0xe0] sm:$0xff]
    %v150 = vld [vmem:[#allocation2 + $0xe8] sm:$0xff]
    %v151 = vld [vmem:[#allocation2 + $0xf0] sm:$0xff]
    %v152 = vld [vmem:[#allocation2 + $0xf8] sm:$0xff]
    %v153 = vld [vmem:[%s4] sm:$0x3]
    %v155 = vlaneseq
    %v156 = vshrl.u32 %v155, 7
    %v157 = vsub.s32 0, %v156
    %v158 = vrot.slane %v153, %v157
    %v159 = vlaneseq
    %v160 = vshrl.u32 %v159, 7
    %v161 = vsub.s32 1, %v160
    %v162 = vrot.slane %v153, %v161
    %v197 = vunpack.c.l.b16 %v121
    %v198 = vunpack.c.h.b16 %v121
    %v199 = vunpack.c.l.b16 %v122
    %v200 = vunpack.c.h.b16 %v122
    %v201 = vunpack.c.l.b16 %v123
    %v202 = vunpack.c.h.b16 %v123
    %v203 = vunpack.c.l.b16 %v124
    %v204 = vunpack.c.h.b16 %v124
    %v205 = vunpack.c.l.b16 %v125
    %v206 = vunpack.c.h.b16 %v125
    %v207 = vunpack.c.l.b16 %v126
    %v208 = vunpack.c.h.b16 %v126
    %v209 = vunpack.c.l.b16 %v127
    %v210 = vunpack.c.h.b16 %v127
    %v211 = vunpack.c.l.b16 %v128
    %v212 = vunpack.c.h.b16 %v128
    %v213 = vunpack.c.l.b16 %v129
    %v214 = vunpack.c.h.b16 %v129
    %v215 = vunpack.c.l.b16 %v130
    %v216 = vunpack.c.h.b16 %v130
    %v217 = vunpack.c.l.b16 %v131
    %v218 = vunpack.c.h.b16 %v131
    %v219 = vunpack.c.l.b16 %v132
    %v220 = vunpack.c.h.b16 %v132
    %v221 = vunpack.c.l.b16 %v133
    %v222 = vunpack.c.h.b16 %v133
    %v223 = vunpack.c.l.b16 %v134
    %v224 = vunpack.c.h.b16 %v134
    %v225 = vunpack.c.l.b16 %v135
    %v226 = vunpack.c.h.b16 %v135
    %v227 = vunpack.c.l.b16 %v136
    %v228 = vunpack.c.h.b16 %v136
    %v229 = vunpack.c.l.b16 %v137
    %v230 = vunpack.c.h.b16 %v137
    %v231 = vunpack.c.l.b16 %v138
    %v232 = vunpack.c.h.b16 %v138
    %v233 = vunpack.c.l.b16 %v139
    %v234 = vunpack.c.h.b16 %v139
    %v235 = vunpack.c.l.b16 %v140
    %v236 = vunpack.c.h.b16 %v140
    %v237 = vunpack.c.l.b16 %v141
    %v238 = vunpack.c.h.b16 %v141
    %v239 = vunpack.c.l.b16 %v142
    %v240 = vunpack.c.h.b16 %v142
    %v241 = vunpack.c.l.b16 %v143
    %v242 = vunpack.c.h.b16 %v143
    %v243 = vunpack.c.l.b16 %v144
    %v244 = vunpack.c.h.b16 %v144
    %v245 = vunpack.c.l.b16 %v145
    %v246 = vunpack.c.h.b16 %v145
    %v247 = vunpack.c.l.b16 %v146
    %v248 = vunpack.c.h.b16 %v146
    %v249 = vunpack.c.l.b16 %v147
    %v250 = vunpack.c.h.b16 %v147
    %v251 = vunpack.c.l.b16 %v148
    %v252 = vunpack.c.h.b16 %v148
    %v253 = vunpack.c.l.b16 %v149
    %v254 = vunpack.c.h.b16 %v149
    %v255 = vunpack.c.l.b16 %v150
    %v256 = vunpack.c.h.b16 %v150
    %v257 = vunpack.c.l.b16 %v151
    %v258 = vunpack.c.h.b16 %v151
    %v259 = vunpack.c.l.b16 %v152
    %v260 = vunpack.c.h.b16 %v152
    %v261 = vpack.c.b16 %v199, %v197
    %v262 = vpack.c.b16 %v200, %v198
    %v263 = vpack.c.b16 %v203, %v201
    %v264 = vpack.c.b16 %v204, %v202
    %v265 = vpack.c.b16 %v207, %v205
    %v266 = vpack.c.b16 %v208, %v206
    %v267 = vpack.c.b16 %v211, %v209
    %v268 = vpack.c.b16 %v212, %v210
    %v269 = vpack.c.b16 %v215, %v213
    %v270 = vpack.c.b16 %v216, %v214
    %v271 = vpack.c.b16 %v219, %v217
    %v272 = vpack.c.b16 %v220, %v218
    %v273 = vpack.c.b16 %v223, %v221
    %v274 = vpack.c.b16 %v224, %v222
    %v275 = vpack.c.b16 %v227, %v225
    %v276 = vpack.c.b16 %v228, %v226
    %v277 = vpack.c.b16 %v231, %v229
    %v278 = vpack.c.b16 %v232, %v230
    %v279 = vpack.c.b16 %v235, %v233
    %v280 = vpack.c.b16 %v236, %v234
    %v281 = vpack.c.b16 %v239, %v237
    %v282 = vpack.c.b16 %v240, %v238
    %v283 = vpack.c.b16 %v243, %v241
    %v284 = vpack.c.b16 %v244, %v242
    %v285 = vpack.c.b16 %v247, %v245
    %v286 = vpack.c.b16 %v248, %v246
    %v287 = vpack.c.b16 %v251, %v249
    %v288 = vpack.c.b16 %v252, %v250
    %v289 = vpack.c.b16 %v255, %v253
    %v290 = vpack.c.b16 %v256, %v254
    %v291 = vpack.c.b16 %v259, %v257
    %v292 = vpack.c.b16 %v260, %v258
    %325 = vmatprep.subr.bf16.mxu0 %v276
    %326 = vmatpush1.bf16.msra.mxu0 %v275
    %327 = vmatprep.subr.bf16.mxu0 %v274
    %328 = vmatpush1.bf16.msra.mxu0 %v273
    %329 = vmatprep.subr.bf16.mxu0 %v272
    %330 = vmatpush1.bf16.msra.mxu0 %v271
    %331 = vmatprep.subr.bf16.mxu0 %v270
    %332 = vmatpush1.bf16.msra.mxu0 %v269
    %333 = vmatprep.subr.bf16.mxu0 %v268
    %334 = vmatpush1.bf16.msra.mxu0 %v267
    %335 = vmatprep.subr.bf16.mxu0 %v266
    %336 = vmatpush1.bf16.msra.mxu0 %v265
    %337 = vmatprep.subr.bf16.mxu0 %v264
    %338 = vmatpush1.bf16.msra.mxu0 %v263
    %339 = vmatprep.subr.bf16.mxu0 %v262
    %340 = vmatpush1.bf16.msra.mxu0 %v261
    %341 = vmatprep.subr.bf16.mxu0 %v292
    %342 = vmatpush2.bf16.msra.mxu0 %v291
    %343 = vmatprep.subr.bf16.mxu0 %v290
    %344 = vmatpush2.bf16.msra.mxu0 %v289
    %345 = vmatprep.subr.bf16.mxu0 %v288
    %346 = vmatpush2.bf16.msra.mxu0 %v287
    %347 = vmatprep.subr.bf16.mxu0 %v286
    %348 = vmatpush2.bf16.msra.mxu0 %v285
    %349 = vmatprep.subr.bf16.mxu0 %v284
    %350 = vmatpush2.bf16.msra.mxu0 %v283
    %351 = vmatprep.subr.bf16.mxu0 %v282
    %352 = vmatpush2.bf16.msra.mxu0 %v281
    %353 = vmatprep.subr.bf16.mxu0 %v280
    %354 = vmatpush2.bf16.msra.mxu0 %v279
    %355 = vmatprep.subr.bf16.mxu0 %v278
    %356 = vmatpush2.bf16.msra.mxu0 %v277
    %357 = vmatprep.mubr.bf16.mxu0 %v120
    %358 = vmatmul.mubr.bf16.gmra.mxu0 %v119
    %v359 = vpop.f32.mrf.mxu0
    %v360 = vadd.f32 %v158, %v359
    %v361 = vpop.f32.mrf.mxu0
    %v362 = vadd.f32 %v162, %v361
    %v363 = vpop.f32.mrf.mxu0
    %v364 = vadd.f32 %v158, %v363
    %v365 = vpop.f32.mrf.mxu0
    %v366 = vadd.f32 %v162, %v365
    %367 = vdwg.mxu0
    %v368 = vmax.f32 %v360, 0.0
    %v369 = vmax.f32 %v362, 0.0
    %v370 = vmax.f32 %v364, 0.0
    %v371 = vmax.f32 %v366, 0.0
    %v372 = vpack.c.bf16 %v370, %v368
    %v373 = vpack.c.bf16 %v371, %v369
    %v374 = vld [vmem:[%s5] sm:$0xf]
    %v375 = vld [vmem:[%s5 + $0x4] sm:$0xf]
    %v376 = vld [vmem:[%s5 + $0x8] sm:$0xf]
    %v377 = vld [vmem:[%s5 + $0xc] sm:$0xf]
    %v378 = vld [vmem:[%s5 + $0x10] sm:$0xf]
    %v379 = vld [vmem:[%s5 + $0x14] sm:$0xf]
    %v380 = vld [vmem:[%s5 + $0x18] sm:$0xf]
    %v381 = vld [vmem:[%s5 + $0x1c] sm:$0xf]
    %v382 = vld [vmem:[%s5 + $0x20] sm:$0xf]
    %v383 = vld [vmem:[%s5 + $0x24] sm:$0xf]
    %v384 = vld [vmem:[%s5 + $0x28] sm:$0xf]
    %v385 = vld [vmem:[%s5 + $0x2c] sm:$0xf]
    %v386 = vld [vmem:[%s5 + $0x30] sm:$0xf]
    %v387 = vld [vmem:[%s5 + $0x34] sm:$0xf]
    %v388 = vld [vmem:[%s5 + $0x38] sm:$0xf]
    %v389 = vld [vmem:[%s5 + $0x3c] sm:$0xf]
    %v390 = vld [vmem:[%s5 + $0x40] sm:$0xf]
    %v391 = vld [vmem:[%s5 + $0x44] sm:$0xf]
    %v392 = vld [vmem:[%s5 + $0x48] sm:$0xf]
    %v393 = vld [vmem:[%s5 + $0x4c] sm:$0xf]
    %v394 = vld [vmem:[%s5 + $0x50] sm:$0xf]
    %v395 = vld [vmem:[%s5 + $0x54] sm:$0xf]
    %v396 = vld [vmem:[%s5 + $0x58] sm:$0xf]
    %v397 = vld [vmem:[%s5 + $0x5c] sm:$0xf]
    %v398 = vld [vmem:[%s5 + $0x60] sm:$0xf]
    %v399 = vld [vmem:[%s5 + $0x64] sm:$0xf]
    %v400 = vld [vmem:[%s5 + $0x68] sm:$0xf]
    %v401 = vld [vmem:[%s5 + $0x6c] sm:$0xf]
    %v402 = vld [vmem:[%s5 + $0x70] sm:$0xf]
    %v403 = vld [vmem:[%s5 + $0x74] sm:$0xf]
    %v404 = vld [vmem:[%s5 + $0x78] sm:$0xf]
    %v405 = vld [vmem:[%s5 + $0x7c] sm:$0xf]
    %v406 = vld [vmem:[%s6] sm:$0x1]
    %v408 = vlaneseq
    %v409 = vshrl.u32 %v408, 7
    %v410 = vsub.s32 0, %v409
    %v411 = vrot.slane %v406, %v410
    %v445 = vunpack.c.l.b16 %v374
    %v446 = vunpack.c.l.b16 %v375
    %v447 = vunpack.c.l.b16 %v376
    %v448 = vunpack.c.l.b16 %v377
    %v449 = vunpack.c.l.b16 %v378
    %v450 = vunpack.c.l.b16 %v379
    %v451 = vunpack.c.l.b16 %v380
    %v452 = vunpack.c.l.b16 %v381
    %v453 = vunpack.c.l.b16 %v382
    %v454 = vunpack.c.l.b16 %v383
    %v455 = vunpack.c.l.b16 %v384
    %v456 = vunpack.c.l.b16 %v385
    %v457 = vunpack.c.l.b16 %v386
    %v458 = vunpack.c.l.b16 %v387
    %v459 = vunpack.c.l.b16 %v388
    %v460 = vunpack.c.l.b16 %v389
    %v461 = vunpack.c.l.b16 %v390
    %v462 = vunpack.c.l.b16 %v391
    %v463 = vunpack.c.l.b16 %v392
    %v464 = vunpack.c.l.b16 %v393
    %v465 = vunpack.c.l.b16 %v394
    %v466 = vunpack.c.l.b16 %v395
    %v467 = vunpack.c.l.b16 %v396
    %v468 = vunpack.c.l.b16 %v397
    %v469 = vunpack.c.l.b16 %v398
    %v470 = vunpack.c.l.b16 %v399
    %v471 = vunpack.c.l.b16 %v400
    %v472 = vunpack.c.l.b16 %v401
    %v473 = vunpack.c.l.b16 %v402
    %v474 = vunpack.c.l.b16 %v403
    %v475 = vunpack.c.l.b16 %v404
    %v476 = vunpack.c.l.b16 %v405
    %v477 = vpack.c.b16 %v446, %v445
    %v478 = vpack.c.b16 %v448, %v447
    %v479 = vpack.c.b16 %v450, %v449
    %v480 = vpack.c.b16 %v452, %v451
    %v481 = vpack.c.b16 %v454, %v453
    %v482 = vpack.c.b16 %v456, %v455
    %v483 = vpack.c.b16 %v458, %v457
    %v484 = vpack.c.b16 %v460, %v459
    %v485 = vpack.c.b16 %v462, %v461
    %v486 = vpack.c.b16 %v464, %v463
    %v487 = vpack.c.b16 %v466, %v465
    %v488 = vpack.c.b16 %v468, %v467
    %v489 = vpack.c.b16 %v470, %v469
    %v490 = vpack.c.b16 %v472, %v471
    %v491 = vpack.c.b16 %v474, %v473
    %v492 = vpack.c.b16 %v476, %v475
    %509 = vmatprep.subr.bf16.mxu0 0
    %510 = vmatpush1.bf16.msra.mxu0 %v484
    %511 = vmatprep.subr.bf16.mxu0 0
    %512 = vmatpush1.bf16.msra.mxu0 %v483
    %513 = vmatprep.subr.bf16.mxu0 0
    %514 = vmatpush1.bf16.msra.mxu0 %v482
    %515 = vmatprep.subr.bf16.mxu0 0
    %516 = vmatpush1.bf16.msra.mxu0 %v481
    %517 = vmatprep.subr.bf16.mxu0 0
    %518 = vmatpush1.bf16.msra.mxu0 %v480
    %519 = vmatprep.subr.bf16.mxu0 0
    %520 = vmatpush1.bf16.msra.mxu0 %v479
    %521 = vmatprep.subr.bf16.mxu0 0
    %522 = vmatpush1.bf16.msra.mxu0 %v478
    %523 = vmatprep.subr.bf16.mxu0 0
    %524 = vmatpush1.bf16.msra.mxu0 %v477
    %525 = vmatprep.subr.bf16.mxu0 0
    %526 = vmatpush2.bf16.msra.mxu0 %v492
    %527 = vmatprep.subr.bf16.mxu0 0
    %528 = vmatpush2.bf16.msra.mxu0 %v491
    %529 = vmatprep.subr.bf16.mxu0 0
    %530 = vmatpush2.bf16.msra.mxu0 %v490
    %531 = vmatprep.subr.bf16.mxu0 0
    %532 = vmatpush2.bf16.msra.mxu0 %v489
    %533 = vmatprep.subr.bf16.mxu0 0
    %534 = vmatpush2.bf16.msra.mxu0 %v488
    %535 = vmatprep.subr.bf16.mxu0 0
    %536 = vmatpush2.bf16.msra.mxu0 %v487
    %537 = vmatprep.subr.bf16.mxu0 0
    %538 = vmatpush2.bf16.msra.mxu0 %v486
    %539 = vmatprep.subr.bf16.mxu0 0
    %540 = vmatpush2.bf16.msra.mxu0 %v485
    %541 = vmatprep.mubr.bf16.mxu0 %v373
    %542 = vmatmul.mubr.bf16.gmra.mxu0 %v372
    %v543 = vpop.f32.mrf.mxu0
    %v544 = vadd.f32 %v411, %v543
    %v545 = vpop.f32.mrf.mxu0
    %v546 = vpop.f32.mrf.mxu0
    %v547 = vadd.f32 %v411, %v546
    %v548 = vpop.f32.mrf.mxu0
    %549 = vdwg.mxu0
    %v550 = vtanh.pop %v544
    %v551 = vtanh.pop %v547
    %vm552 = vcmask 31744
    %553 = vst.msk [vmem:[%s7] sm:$0xff] %vm552, %v550
    %554 = vst.msk [vmem:[%s7 + $0x8] sm:$0xff] %vm552, %v551
    // Predicated region
    $region34: #{td3_actor_forward.1} parent=1 // pred_check
      _
    $region35: #{td3_actor_forward.1} parent=1 // pred_check_branch
      %556 = sbr.rel (0) target = $region37
    $region36: #{td3_actor_forward.1} parent=1 // pred_region
      _
    $region37: #{td3_actor_forward.1} parent=1 // pred_fallthru
      _
    // Predicated region
    $region38: #{td3_actor_forward.1} parent=1 // pred_check
      _
    $region39: #{td3_actor_forward.1} parent=1 // pred_check_branch
      %558 = sbr.rel (0) target = $region41
    $region40: #{td3_actor_forward.1} parent=1 // pred_region
      _
    $region41: #{td3_actor_forward.1} parent=1 // pred_fallthru
      _
    %559 = vsyncpa [#allocation3], 1

</llo_original>
